<compile_context>
chip_gen: v6e
topology: v6e:2x2x1
jax: 0.10.0
libtpu: 0.0.40
codegen_flags: <defaults>
</compile_context>

<pallas_src>
import jax
import jax.numpy as jnp
from jax.experimental import pallas as pl
from jax.experimental.pallas import tpu as pltpu

NUM_CLASSES = 5
C_PAD = 128          # class dim padded to a lane-dense 128; sliced back to 5 outside
NUM_CORES = 2        # leading "parallel" grid axis -> both v7x TCs; harmless on 1-TC chips
TK_MAX = 8192        # (8192, 128) f32 W_eff tile = 4 MiB; double-buffered fits all gens


def _tiling(K):
    """Static tiling decision shared by prepare_fnn_params and the forward wrapper."""
    # tk: multiple of 128 (lane-dense x tile / sublane-aligned W_eff tile), capped at TK_MAX.
    tk = min(TK_MAX, max(128, pl.cdiv(K, NUM_CORES * 128) * 128))
    # K_pad: each core gets an equal, whole number of tk-wide tiles.
    K_pad = pl.cdiv(K, NUM_CORES * tk) * (NUM_CORES * tk)
    return tk, K_pad


def fnn_kernel(x_ref, w_ref, o_ref):
    """grid = (NUM_CORES, n_k).

    Axis 0 ("parallel") splits the K reduction across TensorCores; axis 1
    ("arbitrary") streams (tk, C_PAD) tiles of the collapsed weight.  The
    per-core output block (B_pad, C_PAD) stays resident across axis 1 and is
    used directly as the f32 accumulator; partials are summed in the wrapper.
    """
    @pl.when(pl.program_id(1) == 0)
    def _():
        o_ref[...] = jnp.zeros_like(o_ref)

    o_ref[...] += jnp.dot(x_ref[...], w_ref[...],
                          preferred_element_type=jnp.float32)


def prepare_fnn_params(w1, b1, w2, b2):
    """One-time weight preprocessing (hoisted out of the forward path).

    w1: (1024, K) torch layout (out, in); b1: (1024,)
    w2: (5, 1024)  torch layout;          b2: (5,)

    Collapses the two bias-only Linears (valid because there is no activation
    between them):
        logits = (x @ W1^T + b1) @ W2^T + b2 = x @ (W1^T @ W2^T) + (b1 @ W2^T + b2)

    Returns kernel-layout arrays:
      w_eff_p: (K_pad, 128)  collapsed weight, K zero-padded, class dim padded 5 -> 128
      b_eff_p: (1, 128)      collapsed bias, class dim padded
    """
    K = w1.shape[1]
    _, K_pad = _tiling(K)

    w1_t = jnp.transpose(w1).astype(jnp.float32)            # (K, 1024)
    w2_t = jnp.transpose(w2).astype(jnp.float32)            # (1024, 5)
    w_eff = jnp.dot(w1_t, w2_t, preferred_element_type=jnp.float32)      # (K, 5)
    b_eff = jnp.dot(b1.astype(jnp.float32), w2_t) + b2.astype(jnp.float32)  # (5,)

    w_eff_p = jnp.zeros((K_pad, C_PAD), jnp.float32).at[:K, :NUM_CLASSES].set(w_eff)
    b_eff_p = jnp.zeros((1, C_PAD), jnp.float32).at[:, :NUM_CLASSES].set(
        b_eff.reshape(1, NUM_CLASSES))
    return w_eff_p, b_eff_p


@jax.jit
def test_fnn_forward(x_nchw, w_eff_p, b_eff_p):
    """x_nchw: (B, C, H, W) float32; prepared params from prepare_fnn_params.
    Returns logits (B, 5) float32."""
    B = x_nchw.shape[0]
    K = 1
    for d in x_nchw.shape[1:]:
        K *= d
    tk, K_pad = _tiling(K)
    assert w_eff_p.shape == (K_pad, C_PAD), "params were prepared for a different K"

    B_pad = max(8, ((B + 7) // 8) * 8)        # sublane-pad the batch
    n_k = K_pad // (NUM_CORES * tk)           # K tiles per core (static)

    x = x_nchw.reshape(B, K).astype(jnp.float32)   # nn.Flatten semantics
    if B == B_pad and K == K_pad:
        x_p = x
    else:
        x_p = jnp.pad(x, ((0, B_pad - B), (0, K_pad - K)))

    partials = pl.pallas_call(
        fnn_kernel,
        out_shape=jax.ShapeDtypeStruct((NUM_CORES, B_pad, C_PAD), jnp.float32),
        grid_spec=pltpu.PrefetchScalarGridSpec(
            num_scalar_prefetch=0,
            grid=(NUM_CORES, n_k),
            in_specs=[
                # x column tile for this core/step
                pl.BlockSpec((B_pad, tk), lambda c, k: (0, c * n_k + k)),
                # collapsed-weight row tile for this core/step
                pl.BlockSpec((tk, C_PAD), lambda c, k: (c * n_k + k, 0)),
            ],
            # one resident partial-logits block per core (accumulator)
            out_specs=pl.BlockSpec((None, B_pad, C_PAD), lambda c, k: (c, 0, 0)),
        ),
        compiler_params=pltpu.CompilerParams(
            dimension_semantics=("parallel", "arbitrary"),
            vmem_limit_bytes=32 * 1024 * 1024),
        cost_estimate=pl.CostEstimate(
            flops=2 * B_pad * K_pad * C_PAD,
            bytes_accessed=(K_pad * C_PAD + B_pad * K_pad
                            + NUM_CORES * B_pad * C_PAD) * 4,
            transcendentals=0),
    )(x_p, w_eff_p)

    logits_pad = jnp.sum(partials, axis=0) + b_eff_p
    return logits_pad[:B, :NUM_CLASSES]


def _init_params(key, in_features):
    """Deterministic PyTorch-style uniform(-1/sqrt(fan_in), 1/sqrt(fan_in)) init."""
    HIDDEN = 1024
    k1, k2, k3, k4 = jax.random.split(key, 4)
    bound1 = 1.0 / jnp.sqrt(jnp.float32(in_features))
    w1 = jax.random.uniform(k1, (HIDDEN, in_features), jnp.float32, -bound1, bound1)
    b1 = jax.random.uniform(k2, (HIDDEN,), jnp.float32, -bound1, bound1)
    bound2 = 1.0 / jnp.sqrt(jnp.float32(HIDDEN))
    w2 = jax.random.uniform(k3, (NUM_CLASSES, HIDDEN), jnp.float32, -bound2, bound2)
    b2 = jax.random.uniform(k4, (NUM_CLASSES,), jnp.float32, -bound2, bound2)
    return w1, b1, w2, b2


if __name__ == "__main__":
    # Small shapes consistent with the module: B=2, C=4, H=W=16 -> input_size=1024.
    B, C, H, W = 2, 4, 16, 16
    input_size = C * H * W

    key = jax.random.PRNGKey(0)
    kx, kp = jax.random.split(key)
    x = jax.random.normal(kx, (B, C, H, W), jnp.float32)
    w1, b1, w2, b2 = _init_params(kp, input_size)

    # One-time weight collapsing/padding, done outside the per-call hot path.
    prepped = prepare_fnn_params(w1, b1, w2, b2)
    jax.block_until_ready(prepped)

    logits = test_fnn_forward(x, *prepped)
    jax.block_until_ready(logits)

    # Pure-JAX reference of the exact PyTorch forward (un-collapsed, f32).
    x_flat = x.reshape(B, -1)
    ref = (x_flat @ w1.T + b1) @ w2.T + b2

    assert logits.shape == (B, NUM_CLASSES)
    assert jnp.allclose(logits, ref, atol=1e-4, rtol=1e-4)
    print("KERNEL_OK")
</pallas_src>

<mosaic_0001>
module attributes {stable_mosaic.version = 11 : i64} {
  func.func @fnn_kernel(%arg0: i32, %arg1: i32, %arg2: memref<8x512xf32, #tpu.memory_space<vmem>>, %arg3: memref<512x128xf32, #tpu.memory_space<vmem>>, %arg4: memref<1x8x128xf32, #tpu.memory_space<vmem>>) attributes {dimension_semantics = [#tpu.dimension_semantics<parallel>, #tpu.dimension_semantics<arbitrary>], iteration_bounds = array<i64: 2, 1>, scalar_prefetch = 0 : i64, scratch_operands = 0 : i64, tpu.core_type = #tpu.core_type<tc>, window_params = [{transform_indices = @transform_0, window_bounds = array<i64: 8, 512>}, {transform_indices = @transform_1, window_bounds = array<i64: 512, 128>}, {transform_indices = @transform_2, window_bounds = array<i64: 1, 8, 128>}]} {
    %c0_i32 = arith.constant 0 : i32
    %0 = arith.cmpi eq, %arg1, %c0_i32 : i32
    %1 = arith.extui %0 : i1 to i32
    %c0_i32_0 = arith.constant 0 : i32
    %2 = arith.cmpi ne, %1, %c0_i32_0 : i32
    scf.if %2 {
      %cst_10 = arith.constant 0.000000e+00 : f32
      %12 = vector.broadcast %cst_10 : f32 to vector<8x128xf32>
      %c0_11 = arith.constant 0 : index
      %c0_12 = arith.constant 0 : index
      %c0_13 = arith.constant 0 : index
      %13 = vector.load %arg4[%c0_11, %c0_12, %c0_13] : memref<1x8x128xf32, #tpu.memory_space<vmem>>, vector<1x8x128xf32>
      %14 = vector.shape_cast %13 : vector<1x8x128xf32> to vector<8x128xf32>
      %15 = vector.shape_cast %12 : vector<8x128xf32> to vector<1x8x128xf32>
      tpu.vector_store %arg4[%c0_11, %c0_12, %c0_13], %15 {strides = array<i32>} : memref<1x8x128xf32, #tpu.memory_space<vmem>>, vector<1x8x128xf32>,
    } else {
    }
    %c0 = arith.constant 0 : index
    %c0_1 = arith.constant 0 : index
    %c0_2 = arith.constant 0 : index
    %3 = vector.load %arg4[%c0, %c0_1, %c0_2] : memref<1x8x128xf32, #tpu.memory_space<vmem>>, vector<1x8x128xf32>
    %4 = vector.shape_cast %3 : vector<1x8x128xf32> to vector<8x128xf32>
    %c0_3 = arith.constant 0 : index
    %c0_4 = arith.constant 0 : index
    %5 = vector.load %arg2[%c0_3, %c0_4] : memref<8x512xf32, #tpu.memory_space<vmem>>, vector<8x512xf32>
    %c0_5 = arith.constant 0 : index
    %c0_6 = arith.constant 0 : index
    %6 = vector.load %arg3[%c0_5, %c0_6] : memref<512x128xf32, #tpu.memory_space<vmem>>, vector<512x128xf32>
    %cst = arith.constant dense<0.000000e+00> : vector<8x128xf32>
    %7 = tpu.matmul %5, %6, %cst {dimension_numbers = #tpu.dot_dimension_numbers<[1], [0], [0], [1], [0, 0, 1, 1], [], []>} : vector<8x512xf32>, vector<512x128xf32>, vector<8x128xf32> -> vector<8x128xf32>
    %8 = arith.addf %4, %7 : vector<8x128xf32>
    %c0_7 = arith.constant 0 : index
    %c0_8 = arith.constant 0 : index
    %c0_9 = arith.constant 0 : index
    %9 = vector.load %arg4[%c0_7, %c0_8, %c0_9] : memref<1x8x128xf32, #tpu.memory_space<vmem>>, vector<1x8x128xf32>
    %10 = vector.shape_cast %9 : vector<1x8x128xf32> to vector<8x128xf32>
    %11 = vector.shape_cast %8 : vector<8x128xf32> to vector<1x8x128xf32>
    tpu.vector_store %arg4[%c0_7, %c0_8, %c0_9], %11 {strides = array<i32>} : memref<1x8x128xf32, #tpu.memory_space<vmem>>, vector<1x8x128xf32>,
    return
  }
  func.func @transform_0(%arg0: i32, %arg1: i32) -> (i32, i32) {
    %c1_i32 = arith.constant 1 : i32
    %0 = arith.muli %arg0, %c1_i32 : i32
    %1 = arith.addi %0, %arg1 : i32
    %c0_i32 = arith.constant 0 : i32
    %c0_i32_0 = arith.constant 0 : i32
    return %c0_i32, %1 : i32, i32
  }
  func.func @transform_1(%arg0: i32, %arg1: i32) -> (i32, i32) {
    %c1_i32 = arith.constant 1 : i32
    %0 = arith.muli %arg0, %c1_i32 : i32
    %1 = arith.addi %0, %arg1 : i32
    %c0_i32 = arith.constant 0 : i32
    %c0_i32_0 = arith.constant 0 : i32
    return %1, %c0_i32 : i32, i32
  }
  func.func @transform_2(%arg0: i32, %arg1: i32) -> (i32, i32, i32) {
    %c0_i32 = arith.constant 0 : i32
    %c0_i32_0 = arith.constant 0 : i32
    %c0_i32_1 = arith.constant 0 : i32
    return %arg0, %c0_i32, %c0_i32_0 : i32, i32, i32
  }
}

</mosaic_0001>

<llo_original>
// kernel: test_fnn_forward.1
$region0: #{test_fnn_forward.1}
  #allocation0 [shape = 'u32[]', space=smem, size = 0x4, offset = 0x4, fixed_abs, tag = 'smem constant byte address 0x4 - core index']
  #allocation1 [shape = 'u32[144,128]{1,0:T(1,128)}', space=vmem, size = 0x12000, scoped, tag = 'internal scratch']
  %s0 = inlined_call_operand.vmem [shape: f32[8,1024], index: 0, kind: input, shape index: {}]
  %s1 = inlined_call_operand.hbm [shape: f32[1024,128], index: 1, kind: input, shape index: {}]
  %s2 = inlined_call_operand.vmem [shape: f32[2,8,128], index: 2, kind: output, shape index: {}]
  %s3 = sld [smem:[#allocation0]]
  $region49: #{test_fnn_forward.1} parent=0
    _
  %s5 = ssub.s32 1, %s3
  %s6 = scalar_select 0, %s5, %s3
  $region1: #{test_fnn_forward.1} parent=0
    #allocation2 [shape = 'u8[524288]{0}', space=vmem, size = 0x80000, scoped, tag = 'input window, operand 1']
    #allocation3 [shape = 's32[2]{0}', space=sflag, size = 0x8, scoped, tag = 'scoped memory for test_fnn_forward.1']
    %7 = vsyncpa [#allocation3], 0
    %s8 = scalar_lea.sflag [#allocation3], 1
    %9 = vsyncpa %s8, 0
    loop: start=0, step=1, limit=4
    $region2: #{test_fnn_forward.1} parent=1 // loop_pre_header
      _
    $region3: #{test_fnn_forward.1} parent=1 // loop_header
      %s11 = sphi 0, %s15
      %p12 = scmp.ge.s32.totalorder %s11, 4
      %s18 = sphi 0, %s30
      %s19 = sphi 0, %s26
      %s20 = sphi 0, %s18
      %s21 = sphi 0, %s19
      %s22 = sphi 0, %s20
      %s23 = sphi 0, %s21
      %s35 = sphi 0, %s37
      %s38 = sphi 0, %s35
      %s39 = sphi 0, %s38
      %s55 = sphi 0, %s39
      %s63 = sphi 0, %s65
      %s66 = sphi 0, %s63
      %s67 = sphi 0, %s66
      %s83 = sphi 0, %s67
      %s89 = sphi 0, %s91
      %s92 = sphi 0, %s89
      %s93 = sphi 0, %s92
      %s109 = sphi 0, %s93
    $region4: #{test_fnn_forward.1} parent=1 // loop_header_branch
      %14 = sbr.rel (%p12) target = $region8
    $region5: #{test_fnn_forward.1} parent=1 // loop_body
      %s16 = ssub.s32 %s11, 1
      %s17 = ssub.s32 %s11, 2
      %s24 = sadd.s32 1, %s19
      %p25 = scmp.ge.s32.totalorder %s24, 1
      %s26 = scalar_select %p25, 0, %s24
      %s27 = sadd.s32 1, %s18
      %s28 = scalar_select %p25, %s27, %s18
      %p29 = scmp.ge.s32.totalorder %s28, 2
      %s30 = scalar_select %p29, 0, %s28
      %s31 = sadd.s32 %s18, %s19
      %s32 = sadd.s32 %s30, %s26
      %s33 = ssub.s32 %s31, %s32
      %p34 = scmp.eq.s32.totalorder %s33, 0
      %s36 = sadd.s32 %s35, 1
      %s37 = scalar_select %p34, %s35, %s36
      %p40 = pneg %p34
      %p41 = scmp.eq.s32.totalorder %s11, 1
      %p42 = por %p40, %p41
      %p43 = scmp.ne.s32.totalorder %s35, %s38
      %p44 = scmp.eq.s32.totalorder %s11, 0
      %p45 = por %p43, %p44
      %p46 = scmp.ne.s32.totalorder %s35, %s38
      %p47 = scmp.eq.s32.totalorder %s16, 1
      %p48 = por %p46, %p47
      %p49 = scmp.ne.s32.totalorder %s38, %s39
      %p50 = scmp.eq.s32.totalorder %s16, 0
      %p51 = por %p49, %p50
      %p52 = scmp.ne.s32.totalorder %s38, %s39
      %p53 = scmp.eq.s32.totalorder %s17, 1
      %p54 = por %p52, %p53
      %p56 = scmp.ne.s32.totalorder %s39, %s55
      %p57 = scmp.eq.s32.totalorder %s17, 0
      %p58 = por %p56, %p57
      %s59 = sadd.s32 %s18, %s19
      %s60 = sadd.s32 %s30, %s26
      %s61 = ssub.s32 %s59, %s60
      %p62 = scmp.eq.s32.totalorder %s61, 0
      %s64 = sadd.s32 %s63, 1
      %s65 = scalar_select %p62, %s63, %s64
      %p68 = pneg %p62
      %p69 = scmp.eq.s32.totalorder %s11, 1
      %p70 = por %p68, %p69
      %p71 = scmp.ne.s32.totalorder %s63, %s66
      %p72 = scmp.eq.s32.totalorder %s11, 0
      %p73 = por %p71, %p72
      %p74 = scmp.ne.s32.totalorder %s63, %s66
      %p75 = scmp.eq.s32.totalorder %s16, 1
      %p76 = por %p74, %p75
      %p77 = scmp.ne.s32.totalorder %s66, %s67
      %p78 = scmp.eq.s32.totalorder %s16, 0
      %p79 = por %p77, %p78
      %p80 = scmp.ne.s32.totalorder %s66, %s67
      %p81 = scmp.eq.s32.totalorder %s17, 1
      %p82 = por %p80, %p81
      %p84 = scmp.ne.s32.totalorder %s67, %s83
      %p85 = scmp.eq.s32.totalorder %s17, 0
      %p86 = por %p84, %p85
      %s87 = ssub.s32 %s18, %s30
      %p88 = scmp.eq.s32.totalorder %s87, 0
      %s90 = sadd.s32 %s89, 1
      %s91 = scalar_select %p88, %s89, %s90
      %p94 = pneg %p88
      %p95 = scmp.eq.s32.totalorder %s11, 1
      %p96 = por %p94, %p95
      %p97 = scmp.ne.s32.totalorder %s89, %s92
      %p98 = scmp.eq.s32.totalorder %s11, 0
      %p99 = por %p97, %p98
      %p100 = scmp.ne.s32.totalorder %s89, %s92
      %p101 = scmp.eq.s32.totalorder %s16, 1
      %p102 = por %p100, %p101
      %p103 = scmp.ne.s32.totalorder %s92, %s93
      %p104 = scmp.eq.s32.totalorder %s16, 0
      %p105 = por %p103, %p104
      %p106 = scmp.ne.s32.totalorder %s92, %s93
      %p107 = scmp.eq.s32.totalorder %s17, 1
      %p108 = por %p106, %p107
      %p110 = scmp.ne.s32.totalorder %s93, %s109
      %p111 = scmp.eq.s32.totalorder %s17, 0
      %p112 = por %p110, %p111
      %p113 = scmp.le.s32.totalorder 1, %s11
      %p114 = scmp.lt.s32.totalorder %s11, 3
      %p115 = pnand %p113, %p114
      %p116 = pneg %p115
      // Predicated region
      $region9: #{test_fnn_forward.1} parent=5 // pred_check
        _
      $region10: #{test_fnn_forward.1} parent=5 // pred_check_branch
        %118 = sbr.rel (%p115) target = $region12
      $region11: #{test_fnn_forward.1} parent=5 // pred_region
        %s119 = ssub.s32 %s11, 1
      $region12: #{test_fnn_forward.1} parent=5 // pred_fallthru
        _
      %p120 = scmp.lt.s32.totalorder %s11, 2
      // Predicated region
      $region13: #{test_fnn_forward.1} parent=5 // pred_check
        %p121 = pneg %p120
      $region14: #{test_fnn_forward.1} parent=5 // pred_check_branch
        %123 = sbr.rel (%p121) target = $region16
      $region15: #{test_fnn_forward.1} parent=5 // pred_region
        // Predicated region
        $region17: #{test_fnn_forward.1} parent=15 // pred_check
          %p124 = pneg %p45
        $region18: #{test_fnn_forward.1} parent=15 // pred_check_branch
          %126 = sbr.rel (%p124) target = $region20
        $region19: #{test_fnn_forward.1} parent=15 // pred_region
          %s127 = sadd.s32 %s18, %s19
          %s128 = smul.u32 4, %s127
          %p129 = scmp.lt.s32.totalorder %s128, 7
          %s130 = scalar_select %p129, %s128, 7
          %s131 = smul.addr %s130, 8
          %s132 = scalar_lea.vmem %s0, %s131
          %s133 = sadd.s32 %s18, %s19
          %s134 = smul.u32 4, %s133
        $region20: #{test_fnn_forward.1} parent=15 // pred_fallthru
          _
        // Predicated region
        $region21: #{test_fnn_forward.1} parent=15 // pred_check
          %p135 = pneg %p73
        $region22: #{test_fnn_forward.1} parent=15 // pred_check_branch
          %137 = sbr.rel (%p135) target = $region24
        $region23: #{test_fnn_forward.1} parent=15 // pred_region
          %s138 = sand.u32 %s63, 1
          %s139 = scalar_lea.sflag [#allocation3], %s138
          %s140 = sand.u32 %s63, 1
          %s141 = smul.addr %s140, 512
          %s142 = scalar_lea.vmem [#allocation2], %s141
          %s143 = sadd.s32 %s18, %s19
          %s144 = smul.u32 64, %s143
          %s146 = ssub.s32 8192, 8192
          %147 = vsyncadd %s139, %s146
          %s148 = smul.addr %s144, 128
          %s149 = scalar_lea.hbm %s1, %s148
          %s150 = sshll.u32 %s142, 4
          %s151 = int_to_ptr.vmem [resolvable:$true] %s150
          %156 = dma.hbm_to_vmem [thread:$0]  %s149, 8192, %s151, %s139, 128, 128, 8
        $region24: #{test_fnn_forward.1} parent=15 // pred_fallthru
          _
      $region16: #{test_fnn_forward.1} parent=5 // pred_fallthru
        _
      %p157 = scmp.le.s32.totalorder 1, %s11
      %p158 = scmp.lt.s32.totalorder %s11, 3
      %p159 = pnand %p157, %p158
      %p160 = pneg %p159
      // Predicated region
      $region25: #{test_fnn_forward.1} parent=5 // pred_check
        _
      $region26: #{test_fnn_forward.1} parent=5 // pred_check_branch
        %162 = sbr.rel (%p159) target = $region28
      $region27: #{test_fnn_forward.1} parent=5 // pred_region
        %s163 = ssub.s32 %s11, 1
        %s164 = sand.u32 %s66, 1
        %s165 = scalar_lea.sflag [#allocation3], %s164
        %s166 = sand.u32 %s66, 1
        %s167 = smul.addr %s166, 512
        %s168 = scalar_lea.vmem [#allocation2], %s167
        // Predicated region
        $region29: #{test_fnn_forward.1} parent=27 // pred_check
          %p169 = pneg %p79
        $region30: #{test_fnn_forward.1} parent=27 // pred_check_branch
          %171 = sbr.rel (%p169) target = $region32
        $region31: #{test_fnn_forward.1} parent=27 // pred_region
          %172 = dma.done %s165, 8192
        $region32: #{test_fnn_forward.1} parent=27 // pred_fallthru
          _
        %s173 = sadd.s32 %s20, %s21
        %s174 = smul.u32 4, %s173
        %p175 = scmp.lt.s32.totalorder %s174, 7
        %s176 = scalar_select %p175, %s174, 7
        %s177 = smul.addr %s176, 8
        %s178 = scalar_lea.vmem %s0, %s177
        %p179 = pneg %p51
        %p180 = pneg %p48
        %s181 = sand.u32 %s66, 1
        %s182 = scalar_lea.sflag [#allocation3], %s181
        %s183 = sand.u32 %s66, 1
        %s184 = smul.addr %s183, 512
        %s185 = scalar_lea.vmem [#allocation2], %s184
        %p186 = pneg %p79
        %p187 = pneg %p76
        %p188 = pneg %p105
        %p189 = pneg %p102
        %p190 = scmp.lt.s32.totalorder %s20, 1
        %s191 = scalar_select %p190, %s20, 1
        %s192 = smul.addr %s191, 8
        %s193 = scalar_lea.vmem %s2, %s192
        %s194 = sadd.s32 %s20, %s21
        %s195 = smul.u32 4, %s194
        %p196 = scmp.lt.s32.totalorder %s195, 7
        %s197 = scalar_select %p196, %s195, 7
        %s198 = smul.addr %s197, 8
        %s199 = scalar_lea.vmem %s0, %s198
        %s200 = sadd.s32 %s20, %s21
        %s201 = smul.u32 4, %s200
        %s202 = sadd.s32 %s20, %s21
        %s203 = smul.u32 64, %s202
        %p204 = scmp.lt.s32.totalorder %s20, 1
        %s205 = scalar_select %p204, %s20, 1
        %s206 = smul.addr %s205, 8
        %s207 = scalar_lea.vmem %s2, %s206
        %p208 = scmp.eq.s32.totalorder %s21, 0
        // Predicated region
        $region33: #{test_fnn_forward.1} parent=27 // pred_check
          %p209 = pneg %p208
        $region34: #{test_fnn_forward.1} parent=27 // pred_check_branch
          %211 = sbr.rel (%p209) target = $region36
        $region35: #{test_fnn_forward.1} parent=27 // pred_region
          %212 = vst [vmem:[%s207] sm:$0xff] 0.0
        $region36: #{test_fnn_forward.1} parent=27 // pred_fallthru
          _
        %v213 = vld [vmem:[%s207] sm:$0xff]
        %v214 = vld [vmem:[%s199] sm:$0xff]
        %v215 = vld [vmem:[%s199 + $0x8] sm:$0xff]
        %v216 = vld [vmem:[%s199 + $0x10] sm:$0xff]
        %v217 = vld [vmem:[%s199 + $0x18] sm:$0xff]
        %v218 = vld [vmem:[%s168] sm:$0xff]
        %v219 = vld [vmem:[%s168 + $0x8] sm:$0xff]
        %v220 = vld [vmem:[%s168 + $0x10] sm:$0xff]
        %v221 = vld [vmem:[%s168 + $0x18] sm:$0xff]
        %v222 = vld [vmem:[%s168 + $0x20] sm:$0xff]
        %v223 = vld [vmem:[%s168 + $0x28] sm:$0xff]
        %v224 = vld [vmem:[%s168 + $0x30] sm:$0xff]
        %v225 = vld [vmem:[%s168 + $0x38] sm:$0xff]
        %v226 = vld [vmem:[%s168 + $0x40] sm:$0xff]
        %v227 = vld [vmem:[%s168 + $0x48] sm:$0xff]
        %v228 = vld [vmem:[%s168 + $0x50] sm:$0xff]
        %v229 = vld [vmem:[%s168 + $0x58] sm:$0xff]
        %v230 = vld [vmem:[%s168 + $0x60] sm:$0xff]
        %v231 = vld [vmem:[%s168 + $0x68] sm:$0xff]
        %v232 = vld [vmem:[%s168 + $0x70] sm:$0xff]
        %v233 = vld [vmem:[%s168 + $0x78] sm:$0xff]
        %v234 = vld [vmem:[%s168 + $0x80] sm:$0xff]
        %v235 = vld [vmem:[%s168 + $0x88] sm:$0xff]
        %v236 = vld [vmem:[%s168 + $0x90] sm:$0xff]
        %v237 = vld [vmem:[%s168 + $0x98] sm:$0xff]
        %v238 = vld [vmem:[%s168 + $0xa0] sm:$0xff]
        %v239 = vld [vmem:[%s168 + $0xa8] sm:$0xff]
        %v240 = vld [vmem:[%s168 + $0xb0] sm:$0xff]
        %v241 = vld [vmem:[%s168 + $0xb8] sm:$0xff]
        %v242 = vld [vmem:[%s168 + $0xc0] sm:$0xff]
        %v243 = vld [vmem:[%s168 + $0xc8] sm:$0xff]
        %v244 = vld [vmem:[%s168 + $0xd0] sm:$0xff]
        %v245 = vld [vmem:[%s168 + $0xd8] sm:$0xff]
        %v246 = vld [vmem:[%s168 + $0xe0] sm:$0xff]
        %v247 = vld [vmem:[%s168 + $0xe8] sm:$0xff]
        %v248 = vld [vmem:[%s168 + $0xf0] sm:$0xff]
        %v249 = vld [vmem:[%s168 + $0xf8] sm:$0xff]
        %v250 = vld [vmem:[%s168 + $0x100] sm:$0xff]
        %v251 = vld [vmem:[%s168 + $0x108] sm:$0xff]
        %v252 = vld [vmem:[%s168 + $0x110] sm:$0xff]
        %v253 = vld [vmem:[%s168 + $0x118] sm:$0xff]
        %v254 = vld [vmem:[%s168 + $0x120] sm:$0xff]
        %v255 = vld [vmem:[%s168 + $0x128] sm:$0xff]
        %v256 = vld [vmem:[%s168 + $0x130] sm:$0xff]
        %v257 = vld [vmem:[%s168 + $0x138] sm:$0xff]
        %v258 = vld [vmem:[%s168 + $0x140] sm:$0xff]
        %v259 = vld [vmem:[%s168 + $0x148] sm:$0xff]
        %v260 = vld [vmem:[%s168 + $0x150] sm:$0xff]
        %v261 = vld [vmem:[%s168 + $0x158] sm:$0xff]
        %v262 = vld [vmem:[%s168 + $0x160] sm:$0xff]
        %v263 = vld [vmem:[%s168 + $0x168] sm:$0xff]
        %v264 = vld [vmem:[%s168 + $0x170] sm:$0xff]
        %v265 = vld [vmem:[%s168 + $0x178] sm:$0xff]
        %v266 = vld [vmem:[%s168 + $0x180] sm:$0xff]
        %v267 = vld [vmem:[%s168 + $0x188] sm:$0xff]
        %v268 = vld [vmem:[%s168 + $0x190] sm:$0xff]
        %v269 = vld [vmem:[%s168 + $0x198] sm:$0xff]
        %v270 = vld [vmem:[%s168 + $0x1a0] sm:$0xff]
        %v271 = vld [vmem:[%s168 + $0x1a8] sm:$0xff]
        %v272 = vld [vmem:[%s168 + $0x1b0] sm:$0xff]
        %v273 = vld [vmem:[%s168 + $0x1b8] sm:$0xff]
        %v274 = vld [vmem:[%s168 + $0x1c0] sm:$0xff]
        %v275 = vld [vmem:[%s168 + $0x1c8] sm:$0xff]
        %v276 = vld [vmem:[%s168 + $0x1d0] sm:$0xff]
        %v277 = vld [vmem:[%s168 + $0x1d8] sm:$0xff]
        %v278 = vld [vmem:[%s168 + $0x1e0] sm:$0xff]
        %v279 = vld [vmem:[%s168 + $0x1e8] sm:$0xff]
        %v280 = vld [vmem:[%s168 + $0x1f0] sm:$0xff]
        %v281 = vld [vmem:[%s168 + $0x1f8] sm:$0xff]
        %282 = vmatprep.subr.mxu0 0.0
        %283 = vmatpush1.msra.mxu0 %v233
        %284 = vmatprep.subr.mxu0 0.0
        %285 = vmatpush1.msra.mxu0 %v232
        %286 = vmatprep.subr.mxu0 0.0
        %287 = vmatpush1.msra.mxu0 %v231
        %288 = vmatprep.subr.mxu0 0.0
        %289 = vmatpush1.msra.mxu0 %v230
        %290 = vmatprep.subr.mxu0 0.0
        %291 = vmatpush1.msra.mxu0 %v229
        %292 = vmatprep.subr.mxu0 0.0
        %293 = vmatpush1.msra.mxu0 %v228
        %294 = vmatprep.subr.mxu0 0.0
        %295 = vmatpush1.msra.mxu0 %v227
        %296 = vmatprep.subr.mxu0 0.0
        %297 = vmatpush1.msra.mxu0 %v226
        %298 = vmatprep.subr.mxu0 0.0
        %299 = vmatpush1.msra.mxu0 %v225
        %300 = vmatprep.subr.mxu0 0.0
        %301 = vmatpush1.msra.mxu0 %v224
        %302 = vmatprep.subr.mxu0 0.0
        %303 = vmatpush1.msra.mxu0 %v223
        %304 = vmatprep.subr.mxu0 0.0
        %305 = vmatpush1.msra.mxu0 %v222
        %306 = vmatprep.subr.mxu0 0.0
        %307 = vmatpush1.msra.mxu0 %v221
        %308 = vmatprep.subr.mxu0 0.0
        %309 = vmatpush1.msra.mxu0 %v220
        %310 = vmatprep.subr.mxu0 0.0
        %311 = vmatpush1.msra.mxu0 %v219
        %312 = vmatprep.subr.mxu0 0.0
        %313 = vmatpush1.msra.mxu0 %v218
        %314 = vmatprep.subr.mxu0 0.0
        %315 = vmatpush2.msra.mxu0 %v249
        %316 = vmatprep.subr.mxu0 0.0
        %317 = vmatpush2.msra.mxu0 %v248
        %318 = vmatprep.subr.mxu0 0.0
        %319 = vmatpush2.msra.mxu0 %v247
        %320 = vmatprep.subr.mxu0 0.0
        %321 = vmatpush2.msra.mxu0 %v246
        %322 = vmatprep.subr.mxu0 0.0
        %323 = vmatpush2.msra.mxu0 %v245
        %324 = vmatprep.subr.mxu0 0.0
        %325 = vmatpush2.msra.mxu0 %v244
        %326 = vmatprep.subr.mxu0 0.0
        %327 = vmatpush2.msra.mxu0 %v243
        %328 = vmatprep.subr.mxu0 0.0
        %329 = vmatpush2.msra.mxu0 %v242
        %330 = vmatprep.subr.mxu0 0.0
        %331 = vmatpush2.msra.mxu0 %v241
        %332 = vmatprep.subr.mxu0 0.0
        %333 = vmatpush2.msra.mxu0 %v240
        %334 = vmatprep.subr.mxu0 0.0
        %335 = vmatpush2.msra.mxu0 %v239
        %336 = vmatprep.subr.mxu0 0.0
        %337 = vmatpush2.msra.mxu0 %v238
        %338 = vmatprep.subr.mxu0 0.0
        %339 = vmatpush2.msra.mxu0 %v237
        %340 = vmatprep.subr.mxu0 0.0
        %341 = vmatpush2.msra.mxu0 %v236
        %342 = vmatprep.subr.mxu0 0.0
        %343 = vmatpush2.msra.mxu0 %v235
        %344 = vmatprep.subr.mxu0 0.0
        %345 = vmatpush2.msra.mxu0 %v234
        %346 = vmatprep.mubr.f32.mxu0 %v215
        %347 = vmatmul.mubr.f32.gmra.mxu0 %v214
        %v348 = vpop.f32.mrf.mxu0
        %v349 = vadd.f32 0.0, %v348
        %v350 = vpop.f32.mrf.mxu0
        %351 = vdwg.mxu0
        %352 = vmatprep.subr.mxu0 0.0
        %353 = vmatpush1.msra.mxu0 %v265
        %354 = vmatprep.subr.mxu0 0.0
        %355 = vmatpush1.msra.mxu0 %v264
        %356 = vmatprep.subr.mxu0 0.0
        %357 = vmatpush1.msra.mxu0 %v263
        %358 = vmatprep.subr.mxu0 0.0
        %359 = vmatpush1.msra.mxu0 %v262
        %360 = vmatprep.subr.mxu0 0.0
        %361 = vmatpush1.msra.mxu0 %v261
        %362 = vmatprep.subr.mxu0 0.0
        %363 = vmatpush1.msra.mxu0 %v260
        %364 = vmatprep.subr.mxu0 0.0
        %365 = vmatpush1.msra.mxu0 %v259
        %366 = vmatprep.subr.mxu0 0.0
        %367 = vmatpush1.msra.mxu0 %v258
        %368 = vmatprep.subr.mxu0 0.0
        %369 = vmatpush1.msra.mxu0 %v257
        %370 = vmatprep.subr.mxu0 0.0
        %371 = vmatpush1.msra.mxu0 %v256
        %372 = vmatprep.subr.mxu0 0.0
        %373 = vmatpush1.msra.mxu0 %v255
        %374 = vmatprep.subr.mxu0 0.0
        %375 = vmatpush1.msra.mxu0 %v254
        %376 = vmatprep.subr.mxu0 0.0
        %377 = vmatpush1.msra.mxu0 %v253
        %378 = vmatprep.subr.mxu0 0.0
        %379 = vmatpush1.msra.mxu0 %v252
        %380 = vmatprep.subr.mxu0 0.0
        %381 = vmatpush1.msra.mxu0 %v251
        %382 = vmatprep.subr.mxu0 0.0
        %383 = vmatpush1.msra.mxu0 %v250
        %384 = vmatprep.subr.mxu0 0.0
        %385 = vmatpush2.msra.mxu0 %v281
        %386 = vmatprep.subr.mxu0 0.0
        %387 = vmatpush2.msra.mxu0 %v280
        %388 = vmatprep.subr.mxu0 0.0
        %389 = vmatpush2.msra.mxu0 %v279
        %390 = vmatprep.subr.mxu0 0.0
        %391 = vmatpush2.msra.mxu0 %v278
        %392 = vmatprep.subr.mxu0 0.0
        %393 = vmatpush2.msra.mxu0 %v277
        %394 = vmatprep.subr.mxu0 0.0
        %395 = vmatpush2.msra.mxu0 %v276
        %396 = vmatprep.subr.mxu0 0.0
        %397 = vmatpush2.msra.mxu0 %v275
        %398 = vmatprep.subr.mxu0 0.0
        %399 = vmatpush2.msra.mxu0 %v274
        %400 = vmatprep.subr.mxu0 0.0
        %401 = vmatpush2.msra.mxu0 %v273
        %402 = vmatprep.subr.mxu0 0.0
        %403 = vmatpush2.msra.mxu0 %v272
        %404 = vmatprep.subr.mxu0 0.0
        %405 = vmatpush2.msra.mxu0 %v271
        %406 = vmatprep.subr.mxu0 0.0
        %407 = vmatpush2.msra.mxu0 %v270
        %408 = vmatprep.subr.mxu0 0.0
        %409 = vmatpush2.msra.mxu0 %v269
        %410 = vmatprep.subr.mxu0 0.0
        %411 = vmatpush2.msra.mxu0 %v268
        %412 = vmatprep.subr.mxu0 0.0
        %413 = vmatpush2.msra.mxu0 %v267
        %414 = vmatprep.subr.mxu0 0.0
        %415 = vmatpush2.msra.mxu0 %v266
        %416 = vmatprep.mubr.f32.mxu0 %v217
        %417 = vmatmul.mubr.f32.gmra.mxu0 %v216
        %v418 = vpop.f32.mrf.mxu0
        %v419 = vadd.f32 %v349, %v418
        %v420 = vpop.f32.mrf.mxu0
        %421 = vdwg.mxu0
        %v422 = vadd.f32 %v213, %v419
        %423 = vst [vmem:[%s207] sm:$0xff] %v422
        %p424 = scmp.lt.s32.totalorder %s20, 1
        %s425 = scalar_select %p424, %s20, 1
        %s426 = smul.addr %s425, 8
        %s427 = scalar_lea.vmem %s2, %s426
        // Predicated region
        $region37: #{test_fnn_forward.1} parent=27 // pred_check
          %p428 = pneg %p102
        $region38: #{test_fnn_forward.1} parent=27 // pred_check_branch
          %430 = sbr.rel (%p428) target = $region40
        $region39: #{test_fnn_forward.1} parent=27 // pred_region
          _
        $region40: #{test_fnn_forward.1} parent=27 // pred_fallthru
          _
      $region28: #{test_fnn_forward.1} parent=5 // pred_fallthru
        _
      %p431 = scmp.le.s32.totalorder 2, %s11
      // Predicated region
      $region41: #{test_fnn_forward.1} parent=5 // pred_check
        %p432 = pneg %p431
      $region42: #{test_fnn_forward.1} parent=5 // pred_check_branch
        %434 = sbr.rel (%p432) target = $region44
      $region43: #{test_fnn_forward.1} parent=5 // pred_region
        %s435 = ssub.s32 %s11, 2
        // Predicated region
        $region45: #{test_fnn_forward.1} parent=43 // pred_check
          %p436 = pneg %p108
        $region46: #{test_fnn_forward.1} parent=43 // pred_check_branch
          %438 = sbr.rel (%p436) target = $region48
        $region47: #{test_fnn_forward.1} parent=43 // pred_region
          %p439 = scmp.lt.s32.totalorder %s22, 1
          %s440 = scalar_select %p439, %s22, 1
          %s441 = smul.addr %s440, 8
          %s442 = scalar_lea.vmem %s2, %s441
        $region48: #{test_fnn_forward.1} parent=43 // pred_fallthru
          _
      $region44: #{test_fnn_forward.1} parent=5 // pred_fallthru
        _
    $region6: #{test_fnn_forward.1} parent=1 // loop_footer
      %s15 = sadd.s32 1, %s11
    $region7: #{test_fnn_forward.1} parent=1 // loop_footer_branch
      %10 = sbr.rel target = $region3
    $region8: #{test_fnn_forward.1} parent=1 // loop_exit
      _
    %443 = vsyncpa [#allocation3], 1
    %s444 = scalar_lea.sflag [#allocation3], 1
    %445 = vsyncpa %s444, 1

</llo_original>
